<compile_context>
chip_gen: v6e
topology: v6e:2x2x1
jax: 0.10.0
libtpu: 0.0.40
codegen_flags: <defaults>
</compile_context>

<pallas_src>
import functools

import jax
import jax.numpy as jnp
from jax.experimental import pallas as pl
from jax.experimental.pallas import tpu as pltpu

# Plain Python float: kernels must NOT close over jnp array constants.
_NEG_INF = -1e30


def _sim(x, y):
    """x @ y.T on the MXU without materializing a transpose."""
    return jax.lax.dot_general(
        x, y, (((1,), (1,)), ((), ())), preferred_element_type=jnp.float32)


def _pc_kernel(sample_ref, intent_ref, ids_row_ref, ids_col_ref, out_ref,
               a_norm_ref, sim11_ref, *, inv_temp_sqrt):
    """Grid point (v, k): NCE loss of sample view v against intent cluster k.

    sample_ref : (B, D) f32  (resident across the whole cluster loop)
    intent_ref : (B, D) f32  (current cluster)
    ids_row_ref: (1, B) i32 / ids_col_ref: (B, 1) i32
    out_ref    : (1, 1) f32  (per-view accumulator: sum over clusters)
    a_norm_ref : (B, D) f32 scratch (normalized, temperature-folded sample)
    sim11_ref  : (B, B) f32 scratch (unmasked sample self-similarity)
    """
    k = pl.program_id(1)
    B = a_norm_ref.shape[0]

    # Hoisted once-per-view work.
    @pl.when(k == 0)
    def _init():
        a = sample_ref[...]
        norm = jnp.maximum(jnp.sqrt(jnp.sum(a * a, axis=1, keepdims=True)), 1e-12)
        an = a * (inv_temp_sqrt / norm)
        a_norm_ref[...] = an
        sim11_ref[...] = _sim(an, an)
        out_ref[...] = jnp.zeros_like(out_ref)

    an = a_norm_ref[...]

    b = intent_ref[...]
    bnorm = jnp.maximum(jnp.sqrt(jnp.sum(b * b, axis=1, keepdims=True)), 1e-12)
    bn = b * (inv_temp_sqrt / bnorm)

    sim11 = sim11_ref[...]
    sim22 = _sim(bn, bn)
    sim12 = _sim(an, bn)
    sim21 = _sim(bn, an)          # == sim12.T via an extra MXU matmul (no XLU transpose)

    ids_row = ids_row_ref[...]    # (1, B)
    ids_col = ids_col_ref[...]    # (B, 1)
    same_id = ids_col == ids_row  # (B, B)
    eye = (jax.lax.broadcasted_iota(jnp.int32, (B, B), 0)
           == jax.lax.broadcasted_iota(jnp.int32, (B, B), 1))
    off_diag_same = jnp.logical_and(same_id, jnp.logical_not(eye))

    # Positive logit = diag(sim12) (same for both row halves; never masked).
    pos = jnp.sum(jnp.where(eye, sim12, 0.0), axis=1, keepdims=True)   # (B, 1)

    sim11m = jnp.where(same_id, _NEG_INF, sim11)
    sim22m = jnp.where(same_id, _NEG_INF, sim22)
    sim12m = jnp.where(off_diag_same, _NEG_INF, sim12)
    sim21m = jnp.where(off_diag_same, _NEG_INF, sim21)

    # Row-wise logsumexp of logits = [[sim12 | sim11], [sim22 | sim12.T]],
    # computed per half, never materializing the (2B, 2B) concatenation.
    m1 = jnp.maximum(jnp.max(sim12m, axis=1, keepdims=True),
                     jnp.max(sim11m, axis=1, keepdims=True))
    s1 = (jnp.sum(jnp.exp(sim12m - m1), axis=1, keepdims=True)
          + jnp.sum(jnp.exp(sim11m - m1), axis=1, keepdims=True))
    lse1 = jnp.log(s1) + m1

    m2 = jnp.maximum(jnp.max(sim22m, axis=1, keepdims=True),
                     jnp.max(sim21m, axis=1, keepdims=True))
    s2 = (jnp.sum(jnp.exp(sim22m - m2), axis=1, keepdims=True)
          + jnp.sum(jnp.exp(sim21m - m2), axis=1, keepdims=True))
    lse2 = jnp.log(s2) + m2

    # CrossEntropy (labels = arange(2B), mean reduction) for this (view, cluster).
    per_row = (lse1 - pos) + (lse2 - pos)                                # (B, 1)
    loss_k = jnp.sum(per_row, axis=0, keepdims=True) * (1.0 / (2 * B))   # (1, 1)
    out_ref[...] = out_ref[...] + loss_k


def pc_loss_pallas(batch_sample_one, batch_sample_two, intents, intent_ids, temperature):
    """PCLoss.forward fused into a single pallas_call over grid (view, cluster)."""
    K, B, D = intents.shape
    samples = jnp.stack([batch_sample_one, batch_sample_two], axis=0).astype(jnp.float32)
    intents = intents.astype(jnp.float32)
    if intent_ids is None:
        # None <=> every row is its own intent (eye mask only on sim11/sim22).
        ids = jnp.broadcast_to(jnp.arange(B, dtype=jnp.int32)[None, :], (K, B))
    else:
        ids = intent_ids.astype(jnp.int32)
    ids_row = ids.reshape(K, 1, B)   # lane-major layout
    ids_col = ids.reshape(K, B, 1)   # sublane layout (avoids in-kernel transpose)

    kernel = functools.partial(
        _pc_kernel, inv_temp_sqrt=(1.0 / float(temperature)) ** 0.5)

    per_view = pl.pallas_call(
        kernel,
        out_shape=jax.ShapeDtypeStruct((2, 1, 1), jnp.float32),
        grid=(2, K),
        in_specs=[
            pl.BlockSpec((None, B, D), lambda v, k: (v, 0, 0)),   # sample view
            pl.BlockSpec((None, B, D), lambda v, k: (k, 0, 0)),   # intent cluster
            pl.BlockSpec((None, 1, B), lambda v, k: (k, 0, 0)),   # ids (row layout)
            pl.BlockSpec((None, B, 1), lambda v, k: (k, 0, 0)),   # ids (col layout)
        ],
        out_specs=pl.BlockSpec((None, 1, 1), lambda v, k: (v, 0, 0)),
        scratch_shapes=[pltpu.VMEM((B, D), jnp.float32),
                        pltpu.VMEM((B, B), jnp.float32)],
        compiler_params=pltpu.CompilerParams(
            dimension_semantics=("parallel", "arbitrary")),
    )(samples, intents, ids_row, ids_col)

    # per_view[v] = sum_k NCE(sample_v, intent_k); PCLoss averages the 2K terms.
    return jnp.sum(per_view) / (2.0 * K)


# ------------------------- pure-JAX reference --------------------------------
def _nce_ref(a, b, ids, temperature):
    B = a.shape[0]
    a = a / jnp.maximum(jnp.linalg.norm(a, axis=1, keepdims=True), 1e-12)
    b = b / jnp.maximum(jnp.linalg.norm(b, axis=1, keepdims=True), 1e-12)
    sim11 = a @ a.T / temperature
    sim22 = b @ b.T / temperature
    sim12 = a @ b.T / temperature
    if ids is None:
        ids = jnp.arange(B, dtype=jnp.int32)
    same = ids.reshape(-1, 1) == ids.reshape(1, -1)
    eye = jnp.eye(B, dtype=bool)
    sim11 = jnp.where(same, _NEG_INF, sim11)
    sim22 = jnp.where(same, _NEG_INF, sim22)
    sim12 = jnp.where(same & ~eye, _NEG_INF, sim12)
    logits = jnp.concatenate(
        [jnp.concatenate([sim12, sim11], -1),
         jnp.concatenate([sim22, sim12.T], -1)], 0)
    labels = jnp.arange(2 * B)
    lse = jax.scipy.special.logsumexp(logits, axis=-1)
    return jnp.mean(lse - logits[labels, labels])


def _pc_ref(s1, s2, intents, intent_ids, temperature):
    K = intents.shape[0]
    total = 0.0
    for k in range(K):
        ids_k = None if intent_ids is None else intent_ids[k]
        total = total + _nce_ref(s1, intents[k], ids_k, temperature)
        total = total + _nce_ref(s2, intents[k], ids_k, temperature)
    return total / (2.0 * K)


# ------------------------------- main -----------------------------------------
if __name__ == "__main__":
    key = jax.random.PRNGKey(0)
    B, D, K = 8, 32, 4           # batch, hidden, num_clusters
    temperature = 0.5

    k1, k2, k3, k4 = jax.random.split(key, 4)
    batch_sample_one = jax.random.normal(k1, (B, D), jnp.float32)
    batch_sample_two = jax.random.normal(k2, (B, D), jnp.float32)
    intents = jax.random.normal(k3, (K, B, D), jnp.float32)
    intent_ids = jax.random.randint(k4, (K, B), 0, 3, jnp.int32)

    loss = pc_loss_pallas(batch_sample_one, batch_sample_two, intents,
                          intent_ids, temperature)
    loss = jax.block_until_ready(loss)
    ref = _pc_ref(batch_sample_one, batch_sample_two, intents, intent_ids,
                  temperature)
    assert jnp.isfinite(loss), "loss is not finite"
    assert abs(float(loss) - float(ref)) < 1e-4, (float(loss), float(ref))

    # intent_ids=None branch (eye-mask only), handled by the same kernel.
    loss_none = pc_loss_pallas(batch_sample_one, batch_sample_two, intents,
                               None, temperature)
    loss_none = jax.block_until_ready(loss_none)
    ref_none = _pc_ref(batch_sample_one, batch_sample_two, intents, None,
                       temperature)
    assert abs(float(loss_none) - float(ref_none)) < 1e-4, (
        float(loss_none), float(ref_none))

    print("KERNEL_OK")
</pallas_src>

<mosaic_0001>
module attributes {stable_mosaic.version = 11 : i64} {
  func.func @_pc_kernel(%arg0: i32, %arg1: i32, %arg2: memref<1x8x32xf32, #tpu.memory_space<vmem>>, %arg3: memref<1x8x32xf32, #tpu.memory_space<vmem>>, %arg4: memref<1x1x8xi32, #tpu.memory_space<vmem>>, %arg5: memref<1x8x1xi32, #tpu.memory_space<vmem>>, %arg6: memref<1x1x1xf32, #tpu.memory_space<vmem>>, %arg7: memref<8x32xf32, #tpu.memory_space<vmem>>, %arg8: memref<8x8xf32, #tpu.memory_space<vmem>>) attributes {dimension_semantics = [#tpu.dimension_semantics<parallel>, #tpu.dimension_semantics<arbitrary>], iteration_bounds = array<i64: 2, 4>, scalar_prefetch = 0 : i64, scratch_operands = 2 : i64, tpu.core_type = #tpu.core_type<tc>, window_params = [{transform_indices = @transform_0, window_bounds = array<i64: 1, 8, 32>}, {transform_indices = @transform_1, window_bounds = array<i64: 1, 8, 32>}, {transform_indices = @transform_2, window_bounds = array<i64: 1, 1, 8>}, {transform_indices = @transform_3, window_bounds = array<i64: 1, 8, 1>}, {transform_indices = @transform_4, window_bounds = array<i64: 1, 1, 1>}]} {
    %c0_i32 = arith.constant 0 : i32
    %0 = arith.cmpi eq, %arg1, %c0_i32 : i32
    %1 = arith.extui %0 : i1 to i32
    %c0_i32_0 = arith.constant 0 : i32
    %2 = arith.cmpi ne, %1, %c0_i32_0 : i32
    scf.if %2 {
      %c0_41 = arith.constant 0 : index
      %c0_42 = arith.constant 0 : index
      %c0_43 = arith.constant 0 : index
      %93 = vector.load %arg2[%c0_41, %c0_42, %c0_43] : memref<1x8x32xf32, #tpu.memory_space<vmem>>, vector<1x8x32xf32>
      %94 = vector.shape_cast %93 : vector<1x8x32xf32> to vector<8x32xf32>
      %95 = arith.mulf %94, %94 : vector<8x32xf32>
      %cst_44 = arith.constant dense<0.000000e+00> : vector<8xf32>
      %96 = vector.multi_reduction <add>, %95, %cst_44 [1] : vector<8x32xf32> to vector<8xf32>
      %97 = vector.shape_cast %96 : vector<8xf32> to vector<8x1xf32>
      %98 = math.sqrt %97 : vector<8x1xf32>
      %cst_45 = arith.constant 9.99999996E-13 : f32
      %99 = vector.broadcast %cst_45 : f32 to vector<8x1xf32>
      %100 = arith.maximumf %98, %99 : vector<8x1xf32>
      %cst_46 = arith.constant 1.41421354 : f32
      %101 = vector.broadcast %cst_46 : f32 to vector<8x1xf32>
      %102 = arith.divf %101, %100 : vector<8x1xf32>
      %103 = vector.broadcast %102 : vector<8x1xf32> to vector<8x32xf32>
      %104 = arith.mulf %94, %103 : vector<8x32xf32>
      %c0_47 = arith.constant 0 : index
      %c0_48 = arith.constant 0 : index
      %105 = vector.load %arg7[%c0_47, %c0_48] : memref<8x32xf32, #tpu.memory_space<vmem>>, vector<8x32xf32>
      tpu.vector_store %arg7[%c0_47, %c0_48], %104 {strides = array<i32>} : memref<8x32xf32, #tpu.memory_space<vmem>>, vector<8x32xf32>,
      %cst_49 = arith.constant dense<0.000000e+00> : vector<8x8xf32>
      %106 = tpu.matmul %104, %104, %cst_49 {dimension_numbers = #tpu.dot_dimension_numbers<[1], [1], [0], [0], [0, 0, 1, 0], [], []>} : vector<8x32xf32>, vector<8x32xf32>, vector<8x8xf32> -> vector<8x8xf32>
      %c0_50 = arith.constant 0 : index
      %c0_51 = arith.constant 0 : index
      %107 = vector.load %arg8[%c0_50, %c0_51] : memref<8x8xf32, #tpu.memory_space<vmem>>, vector<8x8xf32>
      tpu.vector_store %arg8[%c0_50, %c0_51], %106 {strides = array<i32>} : memref<8x8xf32, #tpu.memory_space<vmem>>, vector<8x8xf32>,
      %cst_52 = arith.constant 0.000000e+00 : f32
      %108 = vector.broadcast %cst_52 : f32 to vector<1x1xf32>
      %c0_53 = arith.constant 0 : index
      %c0_54 = arith.constant 0 : index
      %c0_55 = arith.constant 0 : index
      %109 = vector.load %arg6[%c0_53, %c0_54, %c0_55] : memref<1x1x1xf32, #tpu.memory_space<vmem>>, vector<1x1x1xf32>
      %110 = vector.shape_cast %109 : vector<1x1x1xf32> to vector<1x1xf32>
      %111 = vector.shape_cast %108 : vector<1x1xf32> to vector<1x1x1xf32>
      tpu.vector_store %arg6[%c0_53, %c0_54, %c0_55], %111 {strides = array<i32>} : memref<1x1x1xf32, #tpu.memory_space<vmem>>, vector<1x1x1xf32>,
    } else {
    }
    %c0 = arith.constant 0 : index
    %c0_1 = arith.constant 0 : index
    %3 = vector.load %arg7[%c0, %c0_1] : memref<8x32xf32, #tpu.memory_space<vmem>>, vector<8x32xf32>
    %c0_2 = arith.constant 0 : index
    %c0_3 = arith.constant 0 : index
    %c0_4 = arith.constant 0 : index
    %4 = vector.load %arg3[%c0_2, %c0_3, %c0_4] : memref<1x8x32xf32, #tpu.memory_space<vmem>>, vector<1x8x32xf32>
    %5 = vector.shape_cast %4 : vector<1x8x32xf32> to vector<8x32xf32>
    %6 = arith.mulf %5, %5 : vector<8x32xf32>
    %cst = arith.constant dense<0.000000e+00> : vector<8xf32>
    %7 = vector.multi_reduction <add>, %6, %cst [1] : vector<8x32xf32> to vector<8xf32>
    %8 = vector.shape_cast %7 : vector<8xf32> to vector<8x1xf32>
    %9 = math.sqrt %8 : vector<8x1xf32>
    %cst_5 = arith.constant 9.99999996E-13 : f32
    %10 = vector.broadcast %cst_5 : f32 to vector<8x1xf32>
    %11 = arith.maximumf %9, %10 : vector<8x1xf32>
    %cst_6 = arith.constant 1.41421354 : f32
    %12 = vector.broadcast %cst_6 : f32 to vector<8x1xf32>
    %13 = arith.divf %12, %11 : vector<8x1xf32>
    %14 = vector.broadcast %13 : vector<8x1xf32> to vector<8x32xf32>
    %15 = arith.mulf %5, %14 : vector<8x32xf32>
    %c0_7 = arith.constant 0 : index
    %c0_8 = arith.constant 0 : index
    %16 = vector.load %arg8[%c0_7, %c0_8] : memref<8x8xf32, #tpu.memory_space<vmem>>, vector<8x8xf32>
    %cst_9 = arith.constant dense<0.000000e+00> : vector<8x8xf32>
    %17 = tpu.matmul %15, %15, %cst_9 {dimension_numbers = #tpu.dot_dimension_numbers<[1], [1], [0], [0], [0, 0, 1, 0], [], []>} : vector<8x32xf32>, vector<8x32xf32>, vector<8x8xf32> -> vector<8x8xf32>
    %cst_10 = arith.constant dense<0.000000e+00> : vector<8x8xf32>
    %18 = tpu.matmul %3, %15, %cst_10 {dimension_numbers = #tpu.dot_dimension_numbers<[1], [1], [0], [0], [0, 0, 1, 0], [], []>} : vector<8x32xf32>, vector<8x32xf32>, vector<8x8xf32> -> vector<8x8xf32>
    %cst_11 = arith.constant dense<0.000000e+00> : vector<8x8xf32>
    %19 = tpu.matmul %15, %3, %cst_11 {dimension_numbers = #tpu.dot_dimension_numbers<[1], [1], [0], [0], [0, 0, 1, 0], [], []>} : vector<8x32xf32>, vector<8x32xf32>, vector<8x8xf32> -> vector<8x8xf32>
    %c0_12 = arith.constant 0 : index
    %c0_13 = arith.constant 0 : index
    %c0_14 = arith.constant 0 : index
    %20 = vector.load %arg4[%c0_12, %c0_13, %c0_14] : memref<1x1x8xi32, #tpu.memory_space<vmem>>, vector<1x1x8xi32>
    %21 = vector.shape_cast %20 : vector<1x1x8xi32> to vector<1x8xi32>
    %c0_15 = arith.constant 0 : index
    %c0_16 = arith.constant 0 : index
    %c0_17 = arith.constant 0 : index
    %22 = vector.load %arg5[%c0_15, %c0_16, %c0_17] : memref<1x8x1xi32, #tpu.memory_space<vmem>>, vector<1x8x1xi32>
    %23 = vector.shape_cast %22 : vector<1x8x1xi32> to vector<8x1xi32>
    %24 = vector.broadcast %23 : vector<8x1xi32> to vector<8x8xi32>
    %25 = vector.broadcast %21 : vector<1x8xi32> to vector<8x8xi32>
    %26 = arith.cmpi eq, %24, %25 : vector<8x8xi32>
    %27 = tpu.iota {dimensions = array<i32: 0>} : vector<8x8xi32>
    %28 = tpu.iota {dimensions = array<i32: 1>} : vector<8x8xi32>
    %29 = arith.cmpi eq, %27, %28 : vector<8x8xi32>
    %cst_18 = arith.constant dense<true> : vector<8x8xi1>
    %30 = arith.xori %29, %cst_18 : vector<8x8xi1>
    %31 = arith.andi %26, %30 : vector<8x8xi1>
    %cst_19 = arith.constant 0.000000e+00 : f32
    %32 = vector.broadcast %cst_19 : f32 to vector<8x8xf32>
    %33 = arith.select %29, %18, %32 : vector<8x8xi1>, vector<8x8xf32>
    %cst_20 = arith.constant dense<0.000000e+00> : vector<8xf32>
    %34 = vector.multi_reduction <add>, %33, %cst_20 [1] : vector<8x8xf32> to vector<8xf32>
    %35 = vector.shape_cast %34 : vector<8xf32> to vector<8x1xf32>
    %cst_21 = arith.constant -1.000000e+30 : f32
    %36 = vector.broadcast %cst_21 : f32 to vector<8x8xf32>
    %37 = arith.select %26, %36, %16 : vector<8x8xi1>, vector<8x8xf32>
    %cst_22 = arith.constant -1.000000e+30 : f32
    %38 = vector.broadcast %cst_22 : f32 to vector<8x8xf32>
    %39 = arith.select %26, %38, %17 : vector<8x8xi1>, vector<8x8xf32>
    %cst_23 = arith.constant -1.000000e+30 : f32
    %40 = vector.broadcast %cst_23 : f32 to vector<8x8xf32>
    %41 = arith.select %31, %40, %18 : vector<8x8xi1>, vector<8x8xf32>
    %cst_24 = arith.constant -1.000000e+30 : f32
    %42 = vector.broadcast %cst_24 : f32 to vector<8x8xf32>
    %43 = arith.select %31, %42, %19 : vector<8x8xi1>, vector<8x8xf32>
    %cst_25 = arith.constant dense<0xFF800000> : vector<8xf32>
    %44 = vector.multi_reduction <maximumf>, %41, %cst_25 [1] : vector<8x8xf32> to vector<8xf32>
    %45 = vector.shape_cast %44 : vector<8xf32> to vector<8x1xf32>
    %cst_26 = arith.constant dense<0xFF800000> : vector<8xf32>
    %46 = vector.multi_reduction <maximumf>, %37, %cst_26 [1] : vector<8x8xf32> to vector<8xf32>
    %47 = vector.shape_cast %46 : vector<8xf32> to vector<8x1xf32>
    %48 = arith.maximumf %45, %47 : vector<8x1xf32>
    %49 = vector.broadcast %48 : vector<8x1xf32> to vector<8x8xf32>
    %50 = arith.subf %41, %49 : vector<8x8xf32>
    %51 = math.exp %50 : vector<8x8xf32>
    %cst_27 = arith.constant dense<0.000000e+00> : vector<8xf32>
    %52 = vector.multi_reduction <add>, %51, %cst_27 [1] : vector<8x8xf32> to vector<8xf32>
    %53 = vector.shape_cast %52 : vector<8xf32> to vector<8x1xf32>
    %54 = vector.broadcast %48 : vector<8x1xf32> to vector<8x8xf32>
    %55 = arith.subf %37, %54 : vector<8x8xf32>
    %56 = math.exp %55 : vector<8x8xf32>
    %cst_28 = arith.constant dense<0.000000e+00> : vector<8xf32>
    %57 = vector.multi_reduction <add>, %56, %cst_28 [1] : vector<8x8xf32> to vector<8xf32>
    %58 = vector.shape_cast %57 : vector<8xf32> to vector<8x1xf32>
    %59 = arith.addf %53, %58 : vector<8x1xf32>
    %60 = math.log %59 : vector<8x1xf32>
    %61 = arith.addf %60, %48 : vector<8x1xf32>
    %cst_29 = arith.constant dense<0xFF800000> : vector<8xf32>
    %62 = vector.multi_reduction <maximumf>, %39, %cst_29 [1] : vector<8x8xf32> to vector<8xf32>
    %63 = vector.shape_cast %62 : vector<8xf32> to vector<8x1xf32>
    %cst_30 = arith.constant dense<0xFF800000> : vector<8xf32>
    %64 = vector.multi_reduction <maximumf>, %43, %cst_30 [1] : vector<8x8xf32> to vector<8xf32>
    %65 = vector.shape_cast %64 : vector<8xf32> to vector<8x1xf32>
    %66 = arith.maximumf %63, %65 : vector<8x1xf32>
    %67 = vector.broadcast %66 : vector<8x1xf32> to vector<8x8xf32>
    %68 = arith.subf %39, %67 : vector<8x8xf32>
    %69 = math.exp %68 : vector<8x8xf32>
    %cst_31 = arith.constant dense<0.000000e+00> : vector<8xf32>
    %70 = vector.multi_reduction <add>, %69, %cst_31 [1] : vector<8x8xf32> to vector<8xf32>
    %71 = vector.shape_cast %70 : vector<8xf32> to vector<8x1xf32>
    %72 = vector.broadcast %66 : vector<8x1xf32> to vector<8x8xf32>
    %73 = arith.subf %43, %72 : vector<8x8xf32>
    %74 = math.exp %73 : vector<8x8xf32>
    %cst_32 = arith.constant dense<0.000000e+00> : vector<8xf32>
    %75 = vector.multi_reduction <add>, %74, %cst_32 [1] : vector<8x8xf32> to vector<8xf32>
    %76 = vector.shape_cast %75 : vector<8xf32> to vector<8x1xf32>
    %77 = arith.addf %71, %76 : vector<8x1xf32>
    %78 = math.log %77 : vector<8x1xf32>
    %79 = arith.addf %78, %66 : vector<8x1xf32>
    %80 = arith.subf %61, %35 : vector<8x1xf32>
    %81 = arith.subf %79, %35 : vector<8x1xf32>
    %82 = arith.addf %80, %81 : vector<8x1xf32>
    %cst_33 = arith.constant dense<0.000000e+00> : vector<1xf32>
    %83 = vector.multi_reduction <add>, %82, %cst_33 [0] : vector<8x1xf32> to vector<1xf32>
    %84 = vector.shape_cast %83 : vector<1xf32> to vector<1x1xf32>
    %cst_34 = arith.constant 6.250000e-02 : f32
    %85 = vector.broadcast %cst_34 : f32 to vector<1x1xf32>
    %86 = arith.mulf %84, %85 : vector<1x1xf32>
    %c0_35 = arith.constant 0 : index
    %c0_36 = arith.constant 0 : index
    %c0_37 = arith.constant 0 : index
    %87 = vector.load %arg6[%c0_35, %c0_36, %c0_37] : memref<1x1x1xf32, #tpu.memory_space<vmem>>, vector<1x1x1xf32>
    %88 = vector.shape_cast %87 : vector<1x1x1xf32> to vector<1x1xf32>
    %89 = arith.addf %88, %86 : vector<1x1xf32>
    %c0_38 = arith.constant 0 : index
    %c0_39 = arith.constant 0 : index
    %c0_40 = arith.constant 0 : index
    %90 = vector.load %arg6[%c0_38, %c0_39, %c0_40] : memref<1x1x1xf32, #tpu.memory_space<vmem>>, vector<1x1x1xf32>
    %91 = vector.shape_cast %90 : vector<1x1x1xf32> to vector<1x1xf32>
    %92 = vector.shape_cast %89 : vector<1x1xf32> to vector<1x1x1xf32>
    tpu.vector_store %arg6[%c0_38, %c0_39, %c0_40], %92 {strides = array<i32>} : memref<1x1x1xf32, #tpu.memory_space<vmem>>, vector<1x1x1xf32>,
    return
  }
  func.func @transform_0(%arg0: i32, %arg1: i32) -> (i32, i32, i32) {
    %c0_i32 = arith.constant 0 : i32
    %c0_i32_0 = arith.constant 0 : i32
    %c0_i32_1 = arith.constant 0 : i32
    return %arg0, %c0_i32, %c0_i32_0 : i32, i32, i32
  }
  func.func @transform_1(%arg0: i32, %arg1: i32) -> (i32, i32, i32) {
    %c0_i32 = arith.constant 0 : i32
    %c0_i32_0 = arith.constant 0 : i32
    %c0_i32_1 = arith.constant 0 : i32
    return %arg1, %c0_i32, %c0_i32_0 : i32, i32, i32
  }
  func.func @transform_2(%arg0: i32, %arg1: i32) -> (i32, i32, i32) {
    %c0_i32 = arith.constant 0 : i32
    %c0_i32_0 = arith.constant 0 : i32
    %c0_i32_1 = arith.constant 0 : i32
    return %arg1, %c0_i32, %c0_i32_0 : i32, i32, i32
  }
  func.func @transform_3(%arg0: i32, %arg1: i32) -> (i32, i32, i32) {
    %c0_i32 = arith.constant 0 : i32
    %c0_i32_0 = arith.constant 0 : i32
    %c0_i32_1 = arith.constant 0 : i32
    return %arg1, %c0_i32, %c0_i32_0 : i32, i32, i32
  }
  func.func @transform_4(%arg0: i32, %arg1: i32) -> (i32, i32, i32) {
    %c0_i32 = arith.constant 0 : i32
    %c0_i32_0 = arith.constant 0 : i32
    %c0_i32_1 = arith.constant 0 : i32
    return %arg0, %c0_i32, %c0_i32_0 : i32, i32, i32
  }
}

</mosaic_0001>

<llo_original>
// kernel: tpu_custom_call.1
$region0: #{tpu_custom_call.1}
  #allocation0 [shape = 'u32[]', space=smem, size = 0x4, offset = 0x4, fixed_abs, tag = 'smem constant byte address 0x4 - core index']
  #allocation1 [shape = 'u32[144,128]{1,0:T(1,128)}', space=vmem, size = 0x12000, scoped, tag = 'internal scratch']
  #allocation2 [shape = 'f32[8,32]{1,0:T(8,128)}', space=vmem, size = 0x1000, scoped, tag = 'scratch operand']
  #allocation3 [shape = 'f32[8,8]{1,0:T(8,128)}', space=vmem, size = 0x1000, scoped, tag = 'scratch operand']
  %s0 = inlined_call_operand.hbm [shape: f32[2,8,32], index: 0, kind: input, shape index: {}]
  %s1 = inlined_call_operand.vmem [shape: f32[4,8,32], index: 1, kind: input, shape index: {}]
  %s2 = inlined_call_operand.vmem [shape: s32[4,1,8], index: 2, kind: input, shape index: {}]
  %s3 = inlined_call_operand.vmem [shape: s32[4,8,1], index: 3, kind: input, shape index: {}]
  %s4 = inlined_call_operand.vmem [shape: f32[2,1,1], index: 4, kind: output, shape index: {}]
  %s5 = sld [smem:[#allocation0]]
  $region57: #{tpu_custom_call.1} parent=0
    _
  %s7 = ssub.s32 1, %s5
  %s8 = scalar_select 0, %s7, %s5
  $region1: #{tpu_custom_call.1} parent=0
    #allocation4 [shape = 'u8[8192]{0}', space=vmem, size = 0x2000, scoped, tag = 'input window, operand 0']
    #allocation5 [shape = 's32[2]{0}', space=sflag, size = 0x8, scoped, tag = 'scoped memory for tpu_custom_call.1']
    %9 = vsyncpa [#allocation5], 0
    %s10 = scalar_lea.sflag [#allocation5], 1
    %11 = vsyncpa %s10, 0
    loop: start=0, step=1, limit=10
    $region2: #{tpu_custom_call.1} parent=1 // loop_pre_header
      _
    $region3: #{tpu_custom_call.1} parent=1 // loop_header
      %s13 = sphi 0, %s17
      %p14 = scmp.ge.s32.totalorder %s13, 10
      %s20 = sphi 0, %s32
      %s21 = sphi 0, %s28
      %s22 = sphi 0, %s20
      %s23 = sphi 0, %s21
      %s24 = sphi 0, %s22
      %s25 = sphi 0, %s23
      %s35 = sphi 0, %s37
      %s38 = sphi 0, %s35
      %s39 = sphi 0, %s38
      %s55 = sphi 0, %s39
      %s61 = sphi 0, %s63
      %s64 = sphi 0, %s61
      %s65 = sphi 0, %s64
      %s81 = sphi 0, %s65
      %s87 = sphi 0, %s89
      %s90 = sphi 0, %s87
      %s91 = sphi 0, %s90
      %s107 = sphi 0, %s91
      %s113 = sphi 0, %s115
      %s116 = sphi 0, %s113
      %s117 = sphi 0, %s116
      %s133 = sphi 0, %s117
      %s139 = sphi 0, %s141
      %s142 = sphi 0, %s139
      %s143 = sphi 0, %s142
      %s159 = sphi 0, %s143
    $region4: #{tpu_custom_call.1} parent=1 // loop_header_branch
      %16 = sbr.rel (%p14) target = $region8
    $region5: #{tpu_custom_call.1} parent=1 // loop_body
      %s18 = ssub.s32 %s13, 1
      %s19 = ssub.s32 %s13, 2
      %s26 = sadd.s32 1, %s21
      %p27 = scmp.ge.s32.totalorder %s26, 4
      %s28 = scalar_select %p27, 0, %s26
      %s29 = sadd.s32 1, %s20
      %s30 = scalar_select %p27, %s29, %s20
      %p31 = scmp.ge.s32.totalorder %s30, 2
      %s32 = scalar_select %p31, 0, %s30
      %s33 = ssub.s32 %s20, %s32
      %p34 = scmp.eq.s32.totalorder %s33, 0
      %s36 = sadd.s32 %s35, 1
      %s37 = scalar_select %p34, %s35, %s36
      %p40 = pneg %p34
      %p41 = scmp.eq.s32.totalorder %s13, 7
      %p42 = por %p40, %p41
      %p43 = scmp.ne.s32.totalorder %s35, %s38
      %p44 = scmp.eq.s32.totalorder %s13, 0
      %p45 = por %p43, %p44
      %p46 = scmp.ne.s32.totalorder %s35, %s38
      %p47 = scmp.eq.s32.totalorder %s18, 7
      %p48 = por %p46, %p47
      %p49 = scmp.ne.s32.totalorder %s38, %s39
      %p50 = scmp.eq.s32.totalorder %s18, 0
      %p51 = por %p49, %p50
      %p52 = scmp.ne.s32.totalorder %s38, %s39
      %p53 = scmp.eq.s32.totalorder %s19, 7
      %p54 = por %p52, %p53
      %p56 = scmp.ne.s32.totalorder %s39, %s55
      %p57 = scmp.eq.s32.totalorder %s19, 0
      %p58 = por %p56, %p57
      %s59 = ssub.s32 %s21, %s28
      %p60 = scmp.eq.s32.totalorder %s59, 0
      %s62 = sadd.s32 %s61, 1
      %s63 = scalar_select %p60, %s61, %s62
      %p66 = pneg %p60
      %p67 = scmp.eq.s32.totalorder %s13, 7
      %p68 = por %p66, %p67
      %p69 = scmp.ne.s32.totalorder %s61, %s64
      %p70 = scmp.eq.s32.totalorder %s13, 0
      %p71 = por %p69, %p70
      %p72 = scmp.ne.s32.totalorder %s61, %s64
      %p73 = scmp.eq.s32.totalorder %s18, 7
      %p74 = por %p72, %p73
      %p75 = scmp.ne.s32.totalorder %s64, %s65
      %p76 = scmp.eq.s32.totalorder %s18, 0
      %p77 = por %p75, %p76
      %p78 = scmp.ne.s32.totalorder %s64, %s65
      %p79 = scmp.eq.s32.totalorder %s19, 7
      %p80 = por %p78, %p79
      %p82 = scmp.ne.s32.totalorder %s65, %s81
      %p83 = scmp.eq.s32.totalorder %s19, 0
      %p84 = por %p82, %p83
      %s85 = ssub.s32 %s21, %s28
      %p86 = scmp.eq.s32.totalorder %s85, 0
      %s88 = sadd.s32 %s87, 1
      %s89 = scalar_select %p86, %s87, %s88
      %p92 = pneg %p86
      %p93 = scmp.eq.s32.totalorder %s13, 7
      %p94 = por %p92, %p93
      %p95 = scmp.ne.s32.totalorder %s87, %s90
      %p96 = scmp.eq.s32.totalorder %s13, 0
      %p97 = por %p95, %p96
      %p98 = scmp.ne.s32.totalorder %s87, %s90
      %p99 = scmp.eq.s32.totalorder %s18, 7
      %p100 = por %p98, %p99
      %p101 = scmp.ne.s32.totalorder %s90, %s91
      %p102 = scmp.eq.s32.totalorder %s18, 0
      %p103 = por %p101, %p102
      %p104 = scmp.ne.s32.totalorder %s90, %s91
      %p105 = scmp.eq.s32.totalorder %s19, 7
      %p106 = por %p104, %p105
      %p108 = scmp.ne.s32.totalorder %s91, %s107
      %p109 = scmp.eq.s32.totalorder %s19, 0
      %p110 = por %p108, %p109
      %s111 = ssub.s32 %s21, %s28
      %p112 = scmp.eq.s32.totalorder %s111, 0
      %s114 = sadd.s32 %s113, 1
      %s115 = scalar_select %p112, %s113, %s114
      %p118 = pneg %p112
      %p119 = scmp.eq.s32.totalorder %s13, 7
      %p120 = por %p118, %p119
      %p121 = scmp.ne.s32.totalorder %s113, %s116
      %p122 = scmp.eq.s32.totalorder %s13, 0
      %p123 = por %p121, %p122
      %p124 = scmp.ne.s32.totalorder %s113, %s116
      %p125 = scmp.eq.s32.totalorder %s18, 7
      %p126 = por %p124, %p125
      %p127 = scmp.ne.s32.totalorder %s116, %s117
      %p128 = scmp.eq.s32.totalorder %s18, 0
      %p129 = por %p127, %p128
      %p130 = scmp.ne.s32.totalorder %s116, %s117
      %p131 = scmp.eq.s32.totalorder %s19, 7
      %p132 = por %p130, %p131
      %p134 = scmp.ne.s32.totalorder %s117, %s133
      %p135 = scmp.eq.s32.totalorder %s19, 0
      %p136 = por %p134, %p135
      %s137 = ssub.s32 %s20, %s32
      %p138 = scmp.eq.s32.totalorder %s137, 0
      %s140 = sadd.s32 %s139, 1
      %s141 = scalar_select %p138, %s139, %s140
      %p144 = pneg %p138
      %p145 = scmp.eq.s32.totalorder %s13, 7
      %p146 = por %p144, %p145
      %p147 = scmp.ne.s32.totalorder %s139, %s142
      %p148 = scmp.eq.s32.totalorder %s13, 0
      %p149 = por %p147, %p148
      %p150 = scmp.ne.s32.totalorder %s139, %s142
      %p151 = scmp.eq.s32.totalorder %s18, 7
      %p152 = por %p150, %p151
      %p153 = scmp.ne.s32.totalorder %s142, %s143
      %p154 = scmp.eq.s32.totalorder %s18, 0
      %p155 = por %p153, %p154
      %p156 = scmp.ne.s32.totalorder %s142, %s143
      %p157 = scmp.eq.s32.totalorder %s19, 7
      %p158 = por %p156, %p157
      %p160 = scmp.ne.s32.totalorder %s143, %s159
      %p161 = scmp.eq.s32.totalorder %s19, 0
      %p162 = por %p160, %p161
      %p163 = scmp.le.s32.totalorder 1, %s13
      %p164 = scmp.lt.s32.totalorder %s13, 9
      %p165 = pnand %p163, %p164
      %p166 = pneg %p165
      // Predicated region
      $region9: #{tpu_custom_call.1} parent=5 // pred_check
        _
      $region10: #{tpu_custom_call.1} parent=5 // pred_check_branch
        %168 = sbr.rel (%p165) target = $region12
      $region11: #{tpu_custom_call.1} parent=5 // pred_region
        %s169 = ssub.s32 %s13, 1
      $region12: #{tpu_custom_call.1} parent=5 // pred_fallthru
        _
      %p170 = scmp.lt.s32.totalorder %s13, 8
      // Predicated region
      $region13: #{tpu_custom_call.1} parent=5 // pred_check
        %p171 = pneg %p170
      $region14: #{tpu_custom_call.1} parent=5 // pred_check_branch
        %173 = sbr.rel (%p171) target = $region16
      $region15: #{tpu_custom_call.1} parent=5 // pred_region
        // Predicated region
        $region17: #{tpu_custom_call.1} parent=15 // pred_check
          %p174 = pneg %p45
        $region18: #{tpu_custom_call.1} parent=15 // pred_check_branch
          %176 = sbr.rel (%p174) target = $region20
        $region19: #{tpu_custom_call.1} parent=15 // pred_region
          %s177 = sand.u32 %s35, 1
          %s178 = scalar_lea.sflag [#allocation5], %s177
          %s179 = sand.u32 %s35, 1
          %s180 = smul.addr %s179, 8
          %s181 = scalar_lea.vmem [#allocation4], %s180
          %s183 = ssub.s32 128, 128
          %184 = vsyncadd %s178, %s183
          %s185 = smul.addr %s20, 128
          %s186 = scalar_lea.hbm %s0, %s185
          %s188 = sshll.u32 %s181, 4
          %s189 = int_to_ptr.vmem [resolvable:$true] %s188
          %191 = dma.hbm_to_vmem [thread:$0]  %s186, 128, %s189, %s178
        $region20: #{tpu_custom_call.1} parent=15 // pred_fallthru
          _
        // Predicated region
        $region21: #{tpu_custom_call.1} parent=15 // pred_check
          %p192 = pneg %p71
        $region22: #{tpu_custom_call.1} parent=15 // pred_check_branch
          %194 = sbr.rel (%p192) target = $region24
        $region23: #{tpu_custom_call.1} parent=15 // pred_region
          %p195 = scmp.lt.s32.totalorder %s21, 3
          %s196 = scalar_select %p195, %s21, 3
          %s197 = smul.addr %s196, 8
          %s198 = scalar_lea.vmem %s1, %s197
        $region24: #{tpu_custom_call.1} parent=15 // pred_fallthru
          _
        // Predicated region
        $region25: #{tpu_custom_call.1} parent=15 // pred_check
          %p199 = pneg %p97
        $region26: #{tpu_custom_call.1} parent=15 // pred_check_branch
          %201 = sbr.rel (%p199) target = $region28
        $region27: #{tpu_custom_call.1} parent=15 // pred_region
          %p202 = scmp.lt.s32.totalorder %s21, 3
          %s203 = scalar_select %p202, %s21, 3
          %s204 = scalar_lea.vmem %s2, %s203
        $region28: #{tpu_custom_call.1} parent=15 // pred_fallthru
          _
        // Predicated region
        $region29: #{tpu_custom_call.1} parent=15 // pred_check
          %p205 = pneg %p123
        $region30: #{tpu_custom_call.1} parent=15 // pred_check_branch
          %207 = sbr.rel (%p205) target = $region32
        $region31: #{tpu_custom_call.1} parent=15 // pred_region
          %p208 = scmp.lt.s32.totalorder %s21, 3
          %s209 = scalar_select %p208, %s21, 3
          %s210 = smul.addr %s209, 8
          %s211 = scalar_lea.vmem %s3, %s210
        $region32: #{tpu_custom_call.1} parent=15 // pred_fallthru
          _
      $region16: #{tpu_custom_call.1} parent=5 // pred_fallthru
        _
      %p212 = scmp.le.s32.totalorder 1, %s13
      %p213 = scmp.lt.s32.totalorder %s13, 9
      %p214 = pnand %p212, %p213
      %p215 = pneg %p214
      // Predicated region
      $region33: #{tpu_custom_call.1} parent=5 // pred_check
        _
      $region34: #{tpu_custom_call.1} parent=5 // pred_check_branch
        %217 = sbr.rel (%p214) target = $region36
      $region35: #{tpu_custom_call.1} parent=5 // pred_region
        %s218 = ssub.s32 %s13, 1
        %s219 = sand.u32 %s38, 1
        %s220 = scalar_lea.sflag [#allocation5], %s219
        %s221 = sand.u32 %s38, 1
        %s222 = smul.addr %s221, 8
        %s223 = scalar_lea.vmem [#allocation4], %s222
        // Predicated region
        $region37: #{tpu_custom_call.1} parent=35 // pred_check
          %p224 = pneg %p51
        $region38: #{tpu_custom_call.1} parent=35 // pred_check_branch
          %226 = sbr.rel (%p224) target = $region40
        $region39: #{tpu_custom_call.1} parent=35 // pred_region
          %227 = dma.done %s220, 128
        $region40: #{tpu_custom_call.1} parent=35 // pred_fallthru
          _
        %s228 = sand.u32 %s38, 1
        %s229 = scalar_lea.sflag [#allocation5], %s228
        %s230 = sand.u32 %s38, 1
        %s231 = smul.addr %s230, 8
        %s232 = scalar_lea.vmem [#allocation4], %s231
        %p233 = pneg %p51
        %p234 = pneg %p48
        %p235 = scmp.lt.s32.totalorder %s23, 3
        %s236 = scalar_select %p235, %s23, 3
        %s237 = smul.addr %s236, 8
        %s238 = scalar_lea.vmem %s1, %s237
        %p239 = pneg %p77
        %p240 = pneg %p74
        %p241 = scmp.lt.s32.totalorder %s23, 3
        %s242 = scalar_select %p241, %s23, 3
        %s243 = scalar_lea.vmem %s2, %s242
        %p244 = pneg %p103
        %p245 = pneg %p100
        %p246 = scmp.lt.s32.totalorder %s23, 3
        %s247 = scalar_select %p246, %s23, 3
        %s248 = smul.addr %s247, 8
        %s249 = scalar_lea.vmem %s3, %s248
        %p250 = pneg %p129
        %p251 = pneg %p126
        %p252 = pneg %p155
        %p253 = pneg %p152
        %p254 = scmp.lt.s32.totalorder %s22, 1
        %s255 = scalar_select %p254, %s22, 1
        %s256 = scalar_lea.vmem %s4, %s255
        %p257 = scmp.lt.s32.totalorder %s23, 3
        %s258 = scalar_select %p257, %s23, 3
        %s259 = smul.addr %s258, 8
        %s260 = scalar_lea.vmem %s1, %s259
        %p261 = scmp.lt.s32.totalorder %s23, 3
        %s262 = scalar_select %p261, %s23, 3
        %s263 = scalar_lea.vmem %s2, %s262
        %p264 = scmp.lt.s32.totalorder %s23, 3
        %s265 = scalar_select %p264, %s23, 3
        %s266 = smul.addr %s265, 8
        %s267 = scalar_lea.vmem %s3, %s266
        %p268 = scmp.lt.s32.totalorder %s22, 1
        %s269 = scalar_select %p268, %s22, 1
        %s270 = scalar_lea.vmem %s4, %s269
        %p271 = scmp.eq.s32.totalorder %s23, 0
        // Predicated region
        $region41: #{tpu_custom_call.1} parent=35 // pred_check
          %p272 = pneg %p271
        $region42: #{tpu_custom_call.1} parent=35 // pred_check_branch
          %274 = sbr.rel (%p272) target = $region44
        $region43: #{tpu_custom_call.1} parent=35 // pred_region
          %v275 = vld [vmem:[%s223] sm:$0xff]
          %v276 = vmul.f32 %v275, %v275
          %vm277 = vcmask 261120
          %v278 = vsel %vm277, %v276, 0.0
          %279 = vadd.xlane.f32.xlu0 %v278
          %v280 = vpop.xlane.xlu0 %279
          %v281 = vrsqrt.pop %v280
          %v282 = vmul.f32 %v280, %v281
          %vm283 = vcmp.eq.f32.partialorder %v280, inf
          %v284 = vsel %vm283, %v280, %v282
          %vm285 = vcmp.eq.f32.partialorder %v280, 0.0
          %v286 = vand.u32 %v280, 2147483648
          %v287 = vsel %vm285, %v286, %v284
          %v288 = vmax.f32 %v287, 1e-12
          %v289 = vrcp.pop %v288
          %v290 = vmul.f32 1.4142135, %v289
          %v291 = vmul.f32 %v275, %v290
          %292 = vst.msk [vmem:[#allocation2] sm:$0xff] %vm277, %v291
          %v294 = vsel %vm277, %v291, 0
          %296 = vmatprep.subr.mxu0 0.0
          %297 = vmatpush1.xpose.msra.mxu0 0.0
          %298 = vmatprep.subr.mxu0 0.0
          %299 = vmatpush1.xpose.msra.mxu0 0.0
          %300 = vmatprep.subr.mxu0 0.0
          %301 = vmatpush1.xpose.msra.mxu0 0.0
          %302 = vmatprep.subr.mxu0 0.0
          %303 = vmatpush1.xpose.msra.mxu0 0.0
          %304 = vmatprep.subr.mxu0 0.0
          %305 = vmatpush1.xpose.msra.mxu0 0.0
          %306 = vmatprep.subr.mxu0 0.0
          %307 = vmatpush1.xpose.msra.mxu0 0.0
          %308 = vmatprep.subr.mxu0 0.0
          %309 = vmatpush1.xpose.msra.mxu0 0.0
          %310 = vmatprep.subr.mxu0 0.0
          %311 = vmatpush1.xpose.msra.mxu0 0.0
          %312 = vmatprep.subr.mxu0 0.0
          %313 = vmatpush1.xpose.msra.mxu0 0.0
          %314 = vmatprep.subr.mxu0 0.0
          %315 = vmatpush1.xpose.msra.mxu0 0.0
          %316 = vmatprep.subr.mxu0 0.0
          %317 = vmatpush1.xpose.msra.mxu0 0.0
          %318 = vmatprep.subr.mxu0 0.0
          %319 = vmatpush1.xpose.msra.mxu0 0.0
          %320 = vmatprep.subr.mxu0 0.0
          %321 = vmatpush1.xpose.msra.mxu0 0.0
          %322 = vmatprep.subr.mxu0 0.0
          %323 = vmatpush1.xpose.msra.mxu0 0.0
          %324 = vmatprep.subr.mxu0 0.0
          %325 = vmatpush1.xpose.msra.mxu0 0.0
          %326 = vmatprep.subr.mxu0 0.0
          %327 = vmatpush1.xpose.msra.mxu0 %v294
          %328 = vmatprep.subr.mxu0 0.0
          %329 = vmatpush2.xpose.msra.mxu0 0.0
          %330 = vmatprep.subr.mxu0 0.0
          %331 = vmatpush2.xpose.msra.mxu0 0.0
          %332 = vmatprep.subr.mxu0 0.0
          %333 = vmatpush2.xpose.msra.mxu0 0.0
          %334 = vmatprep.subr.mxu0 0.0
          %335 = vmatpush2.xpose.msra.mxu0 0.0
          %336 = vmatprep.subr.mxu0 0.0
          %337 = vmatpush2.xpose.msra.mxu0 0.0
          %338 = vmatprep.subr.mxu0 0.0
          %339 = vmatpush2.xpose.msra.mxu0 0.0
          %340 = vmatprep.subr.mxu0 0.0
          %341 = vmatpush2.xpose.msra.mxu0 0.0
          %342 = vmatprep.subr.mxu0 0.0
          %343 = vmatpush2.xpose.msra.mxu0 0.0
          %344 = vmatprep.subr.mxu0 0.0
          %345 = vmatpush2.xpose.msra.mxu0 0.0
          %346 = vmatprep.subr.mxu0 0.0
          %347 = vmatpush2.xpose.msra.mxu0 0.0
          %348 = vmatprep.subr.mxu0 0.0
          %349 = vmatpush2.xpose.msra.mxu0 0.0
          %350 = vmatprep.subr.mxu0 0.0
          %351 = vmatpush2.xpose.msra.mxu0 0.0
          %352 = vmatprep.subr.mxu0 0.0
          %353 = vmatpush2.xpose.msra.mxu0 0.0
          %354 = vmatprep.subr.mxu0 0.0
          %355 = vmatpush2.xpose.msra.mxu0 0.0
          %356 = vmatprep.subr.mxu0 0.0
          %357 = vmatpush2.xpose.msra.mxu0 0.0
          %358 = vmatprep.subr.mxu0 0.0
          %359 = vmatpush2.xpose.msra.mxu0 0.0
          %360 = vmatprep.mubr.f32.mxu0 0.0
          %361 = vmatmul.mubr.f32.gmra.mxu0 %v294
          %v362 = vpop.f32.mrf.mxu0
          %v363 = vadd.f32 0.0, %v362
          %v364 = vpop.f32.mrf.mxu0
          %365 = vdwg.mxu0
          %vm366 = vcmask 64512
          %367 = vst.msk [vmem:[#allocation3] sm:$0xff] %vm366, %v363
          %vm368 = vcmask 0
          %369 = vst.msk [vmem:[%s270] sm:$0x1] %vm368, 0.0
        $region44: #{tpu_custom_call.1} parent=35 // pred_fallthru
          _
        %v370 = vld [vmem:[#allocation2] sm:$0xff]
        %v371 = vld [vmem:[%s260] sm:$0xff]
        %v372 = vmul.f32 %v371, %v371
        %vm373 = vcmask 261120
        %v374 = vsel %vm373, %v372, 0.0
        %375 = vadd.xlane.f32.xlu0 %v374
        %v376 = vpop.xlane.xlu0 %375
        %v377 = vrsqrt.pop %v376
        %v378 = vmul.f32 %v376, %v377
        %vm379 = vcmp.eq.f32.partialorder %v376, inf
        %v380 = vsel %vm379, %v376, %v378
        %vm381 = vcmp.eq.f32.partialorder %v376, 0.0
        %v382 = vand.u32 %v376, 2147483648
        %v383 = vsel %vm381, %v382, %v380
        %v384 = vmax.f32 %v383, 1e-12
        %v385 = vrcp.pop %v384
        %v386 = vmul.f32 1.4142135, %v385
        %v387 = vmul.f32 %v371, %v386
        %v388 = vld [vmem:[#allocation3] sm:$0xff]
        %v390 = vsel %vm373, %v387, 0
        %392 = vmatprep.subr.mxu0 0.0
        %393 = vmatpush1.xpose.msra.mxu0 0.0
        %394 = vmatprep.subr.mxu0 0.0
        %395 = vmatpush1.xpose.msra.mxu0 0.0
        %396 = vmatprep.subr.mxu0 0.0
        %397 = vmatpush1.xpose.msra.mxu0 0.0
        %398 = vmatprep.subr.mxu0 0.0
        %399 = vmatpush1.xpose.msra.mxu0 0.0
        %400 = vmatprep.subr.mxu0 0.0
        %401 = vmatpush1.xpose.msra.mxu0 0.0
        %402 = vmatprep.subr.mxu0 0.0
        %403 = vmatpush1.xpose.msra.mxu0 0.0
        %404 = vmatprep.subr.mxu0 0.0
        %405 = vmatpush1.xpose.msra.mxu0 0.0
        %406 = vmatprep.subr.mxu0 0.0
        %407 = vmatpush1.xpose.msra.mxu0 0.0
        %408 = vmatprep.subr.mxu0 0.0
        %409 = vmatpush1.xpose.msra.mxu0 0.0
        %410 = vmatprep.subr.mxu0 0.0
        %411 = vmatpush1.xpose.msra.mxu0 0.0
        %412 = vmatprep.subr.mxu0 0.0
        %413 = vmatpush1.xpose.msra.mxu0 0.0
        %414 = vmatprep.subr.mxu0 0.0
        %415 = vmatpush1.xpose.msra.mxu0 0.0
        %416 = vmatprep.subr.mxu0 0.0
        %417 = vmatpush1.xpose.msra.mxu0 0.0
        %418 = vmatprep.subr.mxu0 0.0
        %419 = vmatpush1.xpose.msra.mxu0 0.0
        %420 = vmatprep.subr.mxu0 0.0
        %421 = vmatpush1.xpose.msra.mxu0 0.0
        %422 = vmatprep.subr.mxu0 0.0
        %423 = vmatpush1.xpose.msra.mxu0 %v390
        %424 = vmatprep.subr.mxu0 0.0
        %425 = vmatpush2.xpose.msra.mxu0 0.0
        %426 = vmatprep.subr.mxu0 0.0
        %427 = vmatpush2.xpose.msra.mxu0 0.0
        %428 = vmatprep.subr.mxu0 0.0
        %429 = vmatpush2.xpose.msra.mxu0 0.0
        %430 = vmatprep.subr.mxu0 0.0
        %431 = vmatpush2.xpose.msra.mxu0 0.0
        %432 = vmatprep.subr.mxu0 0.0
        %433 = vmatpush2.xpose.msra.mxu0 0.0
        %434 = vmatprep.subr.mxu0 0.0
        %435 = vmatpush2.xpose.msra.mxu0 0.0
        %436 = vmatprep.subr.mxu0 0.0
        %437 = vmatpush2.xpose.msra.mxu0 0.0
        %438 = vmatprep.subr.mxu0 0.0
        %439 = vmatpush2.xpose.msra.mxu0 0.0
        %440 = vmatprep.subr.mxu0 0.0
        %441 = vmatpush2.xpose.msra.mxu0 0.0
        %442 = vmatprep.subr.mxu0 0.0
        %443 = vmatpush2.xpose.msra.mxu0 0.0
        %444 = vmatprep.subr.mxu0 0.0
        %445 = vmatpush2.xpose.msra.mxu0 0.0
        %446 = vmatprep.subr.mxu0 0.0
        %447 = vmatpush2.xpose.msra.mxu0 0.0
        %448 = vmatprep.subr.mxu0 0.0
        %449 = vmatpush2.xpose.msra.mxu0 0.0
        %450 = vmatprep.subr.mxu0 0.0
        %451 = vmatpush2.xpose.msra.mxu0 0.0
        %452 = vmatprep.subr.mxu0 0.0
        %453 = vmatpush2.xpose.msra.mxu0 0.0
        %454 = vmatprep.subr.mxu0 0.0
        %455 = vmatpush2.xpose.msra.mxu0 0.0
        %456 = vmatprep.mubr.f32.mxu0 0.0
        %457 = vmatmul.mubr.f32.gmra.mxu0 %v390
        %v458 = vpop.f32.mrf.mxu0
        %v459 = vadd.f32 0.0, %v458
        %v460 = vpop.f32.mrf.mxu0
        %461 = vdwg.mxu0
        %v463 = vsel %vm373, %v370, 0
        %465 = vmatprep.subr.mxu0 0.0
        %466 = vmatpush1.xpose.msra.mxu0 0.0
        %467 = vmatprep.subr.mxu0 0.0
        %468 = vmatpush1.xpose.msra.mxu0 0.0
        %469 = vmatprep.subr.mxu0 0.0
        %470 = vmatpush1.xpose.msra.mxu0 0.0
        %471 = vmatprep.subr.mxu0 0.0
        %472 = vmatpush1.xpose.msra.mxu0 0.0
        %473 = vmatprep.subr.mxu0 0.0
        %474 = vmatpush1.xpose.msra.mxu0 0.0
        %475 = vmatprep.subr.mxu0 0.0
        %476 = vmatpush1.xpose.msra.mxu0 0.0
        %477 = vmatprep.subr.mxu0 0.0
        %478 = vmatpush1.xpose.msra.mxu0 0.0
        %479 = vmatprep.subr.mxu0 0.0
        %480 = vmatpush1.xpose.msra.mxu0 0.0
        %481 = vmatprep.subr.mxu0 0.0
        %482 = vmatpush1.xpose.msra.mxu0 0.0
        %483 = vmatprep.subr.mxu0 0.0
        %484 = vmatpush1.xpose.msra.mxu0 0.0
        %485 = vmatprep.subr.mxu0 0.0
        %486 = vmatpush1.xpose.msra.mxu0 0.0
        %487 = vmatprep.subr.mxu0 0.0
        %488 = vmatpush1.xpose.msra.mxu0 0.0
        %489 = vmatprep.subr.mxu0 0.0
        %490 = vmatpush1.xpose.msra.mxu0 0.0
        %491 = vmatprep.subr.mxu0 0.0
        %492 = vmatpush1.xpose.msra.mxu0 0.0
        %493 = vmatprep.subr.mxu0 0.0
        %494 = vmatpush1.xpose.msra.mxu0 0.0
        %495 = vmatprep.subr.mxu0 0.0
        %496 = vmatpush1.xpose.msra.mxu0 %v390
        %497 = vmatprep.subr.mxu0 0.0
        %498 = vmatpush2.xpose.msra.mxu0 0.0
        %499 = vmatprep.subr.mxu0 0.0
        %500 = vmatpush2.xpose.msra.mxu0 0.0
        %501 = vmatprep.subr.mxu0 0.0
        %502 = vmatpush2.xpose.msra.mxu0 0.0
        %503 = vmatprep.subr.mxu0 0.0
        %504 = vmatpush2.xpose.msra.mxu0 0.0
        %505 = vmatprep.subr.mxu0 0.0
        %506 = vmatpush2.xpose.msra.mxu0 0.0
        %507 = vmatprep.subr.mxu0 0.0
        %508 = vmatpush2.xpose.msra.mxu0 0.0
        %509 = vmatprep.subr.mxu0 0.0
        %510 = vmatpush2.xpose.msra.mxu0 0.0
        %511 = vmatprep.subr.mxu0 0.0
        %512 = vmatpush2.xpose.msra.mxu0 0.0
        %513 = vmatprep.subr.mxu0 0.0
        %514 = vmatpush2.xpose.msra.mxu0 0.0
        %515 = vmatprep.subr.mxu0 0.0
        %516 = vmatpush2.xpose.msra.mxu0 0.0
        %517 = vmatprep.subr.mxu0 0.0
        %518 = vmatpush2.xpose.msra.mxu0 0.0
        %519 = vmatprep.subr.mxu0 0.0
        %520 = vmatpush2.xpose.msra.mxu0 0.0
        %521 = vmatprep.subr.mxu0 0.0
        %522 = vmatpush2.xpose.msra.mxu0 0.0
        %523 = vmatprep.subr.mxu0 0.0
        %524 = vmatpush2.xpose.msra.mxu0 0.0
        %525 = vmatprep.subr.mxu0 0.0
        %526 = vmatpush2.xpose.msra.mxu0 0.0
        %527 = vmatprep.subr.mxu0 0.0
        %528 = vmatpush2.xpose.msra.mxu0 0.0
        %529 = vmatprep.mubr.f32.mxu0 0.0
        %530 = vmatmul.mubr.f32.gmra.mxu0 %v463
        %v531 = vpop.f32.mrf.mxu0
        %v532 = vadd.f32 0.0, %v531
        %v533 = vpop.f32.mrf.mxu0
        %534 = vdwg.mxu0
        %535 = vmatprep.subr.mxu0 0.0
        %536 = vmatpush1.xpose.msra.mxu0 0.0
        %537 = vmatprep.subr.mxu0 0.0
        %538 = vmatpush1.xpose.msra.mxu0 0.0
        %539 = vmatprep.subr.mxu0 0.0
        %540 = vmatpush1.xpose.msra.mxu0 0.0
        %541 = vmatprep.subr.mxu0 0.0
        %542 = vmatpush1.xpose.msra.mxu0 0.0
        %543 = vmatprep.subr.mxu0 0.0
        %544 = vmatpush1.xpose.msra.mxu0 0.0
        %545 = vmatprep.subr.mxu0 0.0
        %546 = vmatpush1.xpose.msra.mxu0 0.0
        %547 = vmatprep.subr.mxu0 0.0
        %548 = vmatpush1.xpose.msra.mxu0 0.0
        %549 = vmatprep.subr.mxu0 0.0
        %550 = vmatpush1.xpose.msra.mxu0 0.0
        %551 = vmatprep.subr.mxu0 0.0
        %552 = vmatpush1.xpose.msra.mxu0 0.0
        %553 = vmatprep.subr.mxu0 0.0
        %554 = vmatpush1.xpose.msra.mxu0 0.0
        %555 = vmatprep.subr.mxu0 0.0
        %556 = vmatpush1.xpose.msra.mxu0 0.0
        %557 = vmatprep.subr.mxu0 0.0
        %558 = vmatpush1.xpose.msra.mxu0 0.0
        %559 = vmatprep.subr.mxu0 0.0
        %560 = vmatpush1.xpose.msra.mxu0 0.0
        %561 = vmatprep.subr.mxu0 0.0
        %562 = vmatpush1.xpose.msra.mxu0 0.0
        %563 = vmatprep.subr.mxu0 0.0
        %564 = vmatpush1.xpose.msra.mxu0 0.0
        %565 = vmatprep.subr.mxu0 0.0
        %566 = vmatpush1.xpose.msra.mxu0 %v463
        %567 = vmatprep.subr.mxu0 0.0
        %568 = vmatpush2.xpose.msra.mxu0 0.0
        %569 = vmatprep.subr.mxu0 0.0
        %570 = vmatpush2.xpose.msra.mxu0 0.0
        %571 = vmatprep.subr.mxu0 0.0
        %572 = vmatpush2.xpose.msra.mxu0 0.0
        %573 = vmatprep.subr.mxu0 0.0
        %574 = vmatpush2.xpose.msra.mxu0 0.0
        %575 = vmatprep.subr.mxu0 0.0
        %576 = vmatpush2.xpose.msra.mxu0 0.0
        %577 = vmatprep.subr.mxu0 0.0
        %578 = vmatpush2.xpose.msra.mxu0 0.0
        %579 = vmatprep.subr.mxu0 0.0
        %580 = vmatpush2.xpose.msra.mxu0 0.0
        %581 = vmatprep.subr.mxu0 0.0
        %582 = vmatpush2.xpose.msra.mxu0 0.0
        %583 = vmatprep.subr.mxu0 0.0
        %584 = vmatpush2.xpose.msra.mxu0 0.0
        %585 = vmatprep.subr.mxu0 0.0
        %586 = vmatpush2.xpose.msra.mxu0 0.0
        %587 = vmatprep.subr.mxu0 0.0
        %588 = vmatpush2.xpose.msra.mxu0 0.0
        %589 = vmatprep.subr.mxu0 0.0
        %590 = vmatpush2.xpose.msra.mxu0 0.0
        %591 = vmatprep.subr.mxu0 0.0
        %592 = vmatpush2.xpose.msra.mxu0 0.0
        %593 = vmatprep.subr.mxu0 0.0
        %594 = vmatpush2.xpose.msra.mxu0 0.0
        %595 = vmatprep.subr.mxu0 0.0
        %596 = vmatpush2.xpose.msra.mxu0 0.0
        %597 = vmatprep.subr.mxu0 0.0
        %598 = vmatpush2.xpose.msra.mxu0 0.0
        %599 = vmatprep.mubr.f32.mxu0 0.0
        %600 = vmatmul.mubr.f32.gmra.mxu0 %v390
        %v601 = vpop.f32.mrf.mxu0
        %v602 = vadd.f32 0.0, %v601
        %v603 = vpop.f32.mrf.mxu0
        %604 = vdwg.mxu0
        %v605 = vld [vmem:[%s263] sm:$0x1]
        %v606 = vld [vmem:[%s267] sm:$0xff]
        %607 = vset.pattern.permute.xlu0 0
        %608 = vperm.xlu0 %607, %v606
        %v609 = vpop.permute.xlu0 %608
        %v610 = vlaneseq
        %v611 = vshrl.u32 %v610, 7
        %v612 = vsub.s32 0, %v611
        %v613 = vrot.slane %v605, %v612
        %vm614 = vcmp.eq.s32.totalorder %v609, %v613
        %v615 = vlaneseq
        %v616 = vshrl.u32 %v615, 7
        %v617 = vlaneseq
        %v618 = vand.u32 %v617, 127
        %vm619 = vcmp.eq.s32.totalorder %v616, %v618
        %vm620 = vmxor %vm619, 1
        %vm621 = vmand %vm614, %vm620
        %v622 = vsel %vm619, %v532, 0.0
        %vm623 = vcmask 64512
        %v624 = vsel %vm623, %v622, 0.0
        %625 = vadd.xlane.f32.xlu0 %v624
        %v626 = vpop.xlane.xlu0 %625
        %v627 = vsel %vm614, -1e+30, %v388
        %v628 = vsel %vm614, -1e+30, %v459
        %v629 = vsel %vm621, -1e+30, %v532
        %v630 = vsel %vm621, -1e+30, %v602
        %v631 = vsel %vm623, %v629, -inf
        %632 = vmax.xlane.f32.xlu0 %v631
        %v633 = vpop.xlane.xlu0 %632
        %v634 = vsel %vm623, %v627, -inf
        %635 = vmax.xlane.f32.xlu0 %v634
        %v636 = vpop.xlane.xlu0 %635
        %v637 = vmax.f32 %v633, %v636
        %v638 = vsub.f32 %v629, %v637
        %v639 = vmul.f32 %v638, 1.442695
        %v640 = vpow.pop %v639
        %v641 = vsel %vm623, %v640, 0.0
        %642 = vadd.xlane.f32.xlu0 %v641
        %v643 = vpop.xlane.xlu0 %642
        %v644 = vsub.f32 %v627, %v637
        %v645 = vmul.f32 %v644, 1.442695
        %v646 = vpow.pop %v645
        %v647 = vsel %vm623, %v646, 0.0
        %648 = vadd.xlane.f32.xlu0 %v647
        %v649 = vpop.xlane.xlu0 %648
        %v650 = vadd.f32 %v643, %v649
        %v651 = vlog2.pop %v650
        %v652 = vmul.f32 %v651, 0.6931472
        %v653 = vadd.f32 %v652, %v637
        %v654 = vsel %vm623, %v628, -inf
        %655 = vmax.xlane.f32.xlu0 %v654
        %v656 = vpop.xlane.xlu0 %655
        %v657 = vsel %vm623, %v630, -inf
        %658 = vmax.xlane.f32.xlu0 %v657
        %v659 = vpop.xlane.xlu0 %658
        %v660 = vmax.f32 %v656, %v659
        %v661 = vsub.f32 %v628, %v660
        %v662 = vmul.f32 %v661, 1.442695
        %v663 = vpow.pop %v662
        %v664 = vsel %vm623, %v663, 0.0
        %665 = vadd.xlane.f32.xlu0 %v664
        %v666 = vpop.xlane.xlu0 %665
        %v667 = vsub.f32 %v630, %v660
        %v668 = vmul.f32 %v667, 1.442695
        %v669 = vpow.pop %v668
        %v670 = vsel %vm623, %v669, 0.0
        %671 = vadd.xlane.f32.xlu0 %v670
        %v672 = vpop.xlane.xlu0 %671
        %v673 = vadd.f32 %v666, %v672
        %v674 = vlog2.pop %v673
        %v675 = vmul.f32 %v674, 0.6931472
        %v676 = vadd.f32 %v675, %v660
        %v677 = vsub.f32 %v653, %v626
        %v678 = vsub.f32 %v676, %v626
        %v679 = vadd.f32 %v677, %v678
        %v680 = vrot.slane %v679, 4
        %v681 = vadd.f32 %v679, %v680
        %v682 = vrot.slane %v681, 2
        %v683 = vadd.f32 %v681, %v682
        %v684 = vrot.slane %v683, 1
        %v685 = vadd.f32 %v683, %v684
        %v686 = vmul.f32 %v685, 0.0625
        %v687 = vld [vmem:[%s270] sm:$0x1]
        %v688 = vadd.f32 %v687, %v686
        %vm689 = vcmask 0
        %690 = vst.msk [vmem:[%s270] sm:$0x1] %vm689, %v688
        %p691 = scmp.lt.s32.totalorder %s22, 1
        %s692 = scalar_select %p691, %s22, 1
        %s693 = scalar_lea.vmem %s4, %s692
        // Predicated region
        $region45: #{tpu_custom_call.1} parent=35 // pred_check
          %p694 = pneg %p152
        $region46: #{tpu_custom_call.1} parent=35 // pred_check_branch
          %696 = sbr.rel (%p694) target = $region48
        $region47: #{tpu_custom_call.1} parent=35 // pred_region
          _
        $region48: #{tpu_custom_call.1} parent=35 // pred_fallthru
          _
      $region36: #{tpu_custom_call.1} parent=5 // pred_fallthru
        _
      %p697 = scmp.le.s32.totalorder 2, %s13
      // Predicated region
      $region49: #{tpu_custom_call.1} parent=5 // pred_check
        %p698 = pneg %p697
      $region50: #{tpu_custom_call.1} parent=5 // pred_check_branch
        %700 = sbr.rel (%p698) target = $region52
      $region51: #{tpu_custom_call.1} parent=5 // pred_region
        %s701 = ssub.s32 %s13, 2
        // Predicated region
        $region53: #{tpu_custom_call.1} parent=51 // pred_check
          %p702 = pneg %p158
        $region54: #{tpu_custom_call.1} parent=51 // pred_check_branch
          %704 = sbr.rel (%p702) target = $region56
        $region55: #{tpu_custom_call.1} parent=51 // pred_region
          %p705 = scmp.lt.s32.totalorder %s24, 1
          %s706 = scalar_select %p705, %s24, 1
          %s707 = scalar_lea.vmem %s4, %s706
        $region56: #{tpu_custom_call.1} parent=51 // pred_fallthru
          _
      $region52: #{tpu_custom_call.1} parent=5 // pred_fallthru
        _
    $region6: #{tpu_custom_call.1} parent=1 // loop_footer
      %s17 = sadd.s32 1, %s13
    $region7: #{tpu_custom_call.1} parent=1 // loop_footer_branch
      %12 = sbr.rel target = $region3
    $region8: #{tpu_custom_call.1} parent=1 // loop_exit
      _
    %708 = vsyncpa [#allocation5], 1
    %s709 = scalar_lea.sflag [#allocation5], 1
    %710 = vsyncpa %s709, 1

</llo_original>
